<compile_context>
chip_gen: v5e
topology: v5e:2x2
jax: 0.10.0
libtpu: 0.0.40
codegen_flags: <defaults>
</compile_context>

<pallas_src>
import functools

import jax
import jax.numpy as jnp
from jax.experimental import pallas as pl
from jax.experimental.pallas import tpu as pltpu

EPS = 1e-5


def _round_up(x, m):
    return (x + m - 1) // m * m


def _pad2d(a, rows, cols):
    r, c = a.shape
    if r == rows and c == cols:
        return a
    return jnp.pad(a, ((0, rows - r), (0, cols - c)))


def _vmem_cap_bytes():
    # Generation-aware VMEM budget: ~96 MiB on 128-MiB parts (v5e/v6e),
    # ~48 MiB on v7x (64 MiB per TensorCore).  Falls back to 48 MiB.
    try:
        cap = int(pltpu.get_tpu_info().vmem_capacity_bytes)
    except Exception:
        cap = 64 * 2**20
    return max(32 * 2**20, min(cap - 16 * 2**20, int(cap * 0.75)))


def _vmem_limit(est_bytes):
    return int(min(_vmem_cap_bytes(), max(32 * 2**20, 2 * int(est_bytes))))


# ----------------------- generic fused matmul kernel ----------------------- #
def _mm_kernel(x_ref, w_ref, b_ref, *rest, apply_relu, mode):
    if mode == "plain":
        (o_ref,) = rest
    elif mode == "residual":
        r_ref, o_ref = rest
    else:  # "gemm2": fused 1x1 shortcut conv as a second GEMM over the M tile
        x2_ref, w2_ref, o_ref = rest

    out = jnp.dot(x_ref[...], w_ref[...], preferred_element_type=jnp.float32)
    out = out + b_ref[...]
    if mode == "residual":
        out = out + r_ref[...].astype(jnp.float32)
    elif mode == "gemm2":
        out = out + jnp.dot(x2_ref[...], w2_ref[...],
                            preferred_element_type=jnp.float32)
    if apply_relu:
        out = jnp.maximum(out, 0.0)
    o_ref[...] = out.astype(o_ref.dtype)


def fused_matmul(x, w, b, *, apply_relu, out_dtype, residual=None, gemm2=None):
    """relu?( x @ w + b [+ residual | + x2 @ w2] ); full-K blocks, (M,N) grid."""
    M, K = x.shape
    Kw, Nw = w.shape
    assert K == Kw
    itm = jnp.dtype(x.dtype).itemsize
    sub = 16 if itm < 4 else 8            # bf16 vregs pack [16, 128]
    tm = 512 if M > 512 else _round_up(M, sub)
    tn = 256 if Nw > 256 else _round_up(Nw, 128)
    Kp = _round_up(K, 128)                # lane-dense contraction dim
    Mp, Np = _round_up(M, tm), _round_up(Nw, tn)

    xp = _pad2d(x, Mp, Kp)
    wp = _pad2d(w, Kp, Np)
    bp = _pad2d(b.reshape(1, -1).astype(jnp.float32), 1, Np)

    in_specs = [
        pl.BlockSpec((tm, Kp), lambda i, j: (i, 0)),
        pl.BlockSpec((Kp, tn), lambda i, j: (0, j)),
        pl.BlockSpec((1, tn), lambda i, j: (0, j)),
    ]
    args = [xp, wp, bp]
    out_item = jnp.dtype(out_dtype).itemsize
    flops = 2 * Mp * Kp * Np
    vmem_est = (2 * (tm * Kp * itm + Kp * tn * itm + tn * 4 + tm * tn * out_item)
                + 2 * tm * tn * 4)

    if residual is not None:
        mode = "residual"
        rp = _pad2d(residual, Mp, Np)     # kept in its own (f32) dtype
        in_specs.append(pl.BlockSpec((tm, tn), lambda i, j: (i, j)))
        args.append(rp)
        vmem_est += 2 * tm * tn * rp.dtype.itemsize
    elif gemm2 is not None:
        mode = "gemm2"
        x2, w2 = gemm2
        K2p = _round_up(x2.shape[1], 128)
        x2p = _pad2d(x2, Mp, K2p)
        w2p = _pad2d(w2, K2p, Np)
        in_specs += [pl.BlockSpec((tm, K2p), lambda i, j: (i, 0)),
                     pl.BlockSpec((K2p, tn), lambda i, j: (0, j))]
        args += [x2p, w2p]
        flops += 2 * Mp * K2p * Np
        vmem_est += 2 * (tm * K2p + K2p * tn) * x2p.dtype.itemsize
    else:
        mode = "plain"

    bytes_accessed = sum(int(a.size) * a.dtype.itemsize for a in args)
    bytes_accessed += Mp * Np * out_item
    cost = pl.CostEstimate(flops=int(flops), transcendentals=0,
                           bytes_accessed=int(bytes_accessed))

    kernel = functools.partial(_mm_kernel, apply_relu=apply_relu, mode=mode)
    out = pl.pallas_call(
        kernel,
        out_shape=jax.ShapeDtypeStruct((Mp, Np), out_dtype),
        grid=(Mp // tm, Np // tn),
        in_specs=in_specs,
        out_specs=pl.BlockSpec((tm, tn), lambda i, j: (i, j)),
        compiler_params=pltpu.CompilerParams(
            dimension_semantics=("parallel", "parallel"),
            vmem_limit_bytes=_vmem_limit(vmem_est)),
        cost_estimate=cost,
    )(*args)
    return out[:M, :Nw]


# --------------------- fused 3x3 conv + BN + ReLU kernel -------------------- #
def _conv3x3_kernel(x_ref, w_ref, b_ref, o_ref, *, taps, ho, wo, ws, cin):
    # x_ref: (1, Hs, Ws, Cg).  Per tap: aligned row/lane slab slice (no window
    # copy), one full-slab MXU matmul, then the kw shift is a slice of the f32
    # result *value* (vreg work overlapping the MXU).  Accumulate in values.
    acc = None
    for t, (roff, coff, c0) in enumerate(taps):
        slab = x_ref[0, roff:roff + ho, :, c0:c0 + cin].reshape(ho * ws, cin)
        res = jnp.dot(slab, w_ref[t], preferred_element_type=jnp.float32)
        res = res.reshape(ho, ws, -1)[:, coff:coff + wo, :]
        acc = res if acc is None else acc + res
    bias = b_ref[...].reshape(1, 1, -1)
    out = jnp.maximum(acc + bias, 0.0)
    o_ref[...] = out[None].astype(o_ref.dtype)


def conv3x3_bn_relu(y_nhwc, w_oihw, scale, bias, stride, compute_dtype):
    """3x3 conv (pad=1, given stride) + folded BN + ReLU, NHWC in/out.
    Input may carry zero-padded channels; output channels padded to 128."""
    N, H, W, Cpad = y_nhwc.shape
    Cout, Cin = w_oihw.shape[:2]
    Coutp = _round_up(Cout, 128)
    s = stride
    Ho = (H - 1) // s + 1
    Wo = (W - 1) // s + 1
    itm = jnp.dtype(compute_dtype).itemsize
    wq = 16 if itm < 4 else 8        # width quantum -> free (sublane) reshapes

    # per-tap weight matrices with BN scale folded, zero-padded
    wt = jnp.transpose(w_oihw, (2, 3, 1, 0)).reshape(9, Cin, Cout)
    wt = wt * scale[None, None, :]
    wt = jnp.pad(wt, ((0, 0), (0, Cpad - Cin), (0, Coutp - Cout)))
    bt = jnp.pad(bias, (0, Coutp - Cout)).reshape(1, Coutp).astype(jnp.float32)

    if s == 1:
        Hs = H + 2
        Ws = _round_up(W + 2, wq)
        # TODO(synk): stage 1 could write straight into this padded buffer to
        #             save one HBM round trip; kept as a single XLA pad here.
        xin = jnp.pad(y_nhwc, ((0, 0), (1, 1), (1, Ws - W - 1), (0, 0)))
        Cg = Cpad
        taps = [(kh, kw, 0) for kh in range(3) for kw in range(3)]
    else:
        # One-time space-to-depth so every in-kernel tap slice stays aligned.
        Hs = max(Ho + 2 // s, -(-(H + 1) // s))
        Ws = _round_up(max(Wo + 2 // s, -(-(W + 1) // s)), wq)
        xp = jnp.pad(y_nhwc, ((0, 0), (1, s * Hs - H - 1),
                              (1, s * Ws - W - 1), (0, 0)))
        xin = xp.reshape(N, Hs, s, Ws, s, Cpad)
        xin = xin.transpose(0, 1, 3, 2, 4, 5).reshape(N, Hs, Ws, s * s * Cpad)
        Cg = s * s * Cpad
        taps = [(kh // s, kw // s, ((kh % s) * s + (kw % s)) * Cpad)
                for kh in range(3) for kw in range(3)]

    xin = xin.astype(compute_dtype)
    wt = wt.astype(compute_dtype)

    flops = 2 * N * Ho * Ws * 9 * Cpad * Coutp
    bytes_accessed = (int(xin.size) * itm + int(wt.size) * itm
                      + N * Ho * Wo * Coutp * itm)
    cost = pl.CostEstimate(flops=int(flops), transcendentals=0,
                           bytes_accessed=int(bytes_accessed))
    vmem_est = (2 * Hs * Ws * Cg * itm          # double-buffered input image
                + 2 * 9 * Cpad * Coutp * itm    # weights (constant index map)
                + 2 * Ho * Wo * Coutp * itm     # double-buffered output
                + 2 * Ho * Ws * Coutp * 4       # acc + per-tap result values
                + Ho * Ws * Cg * itm)           # slab value
    # TODO(synk): very large feature maps on v7x would need row-strip tiling
    #             with a manual halo DMA; whole-image residency is fine here.

    kernel = functools.partial(_conv3x3_kernel, taps=taps,
                               ho=Ho, wo=Wo, ws=Ws, cin=Cpad)
    return pl.pallas_call(
        kernel,
        out_shape=jax.ShapeDtypeStruct((N, Ho, Wo, Coutp), compute_dtype),
        grid=(N,),
        in_specs=[
            pl.BlockSpec((1, Hs, Ws, Cg), lambda n: (n, 0, 0, 0)),
            pl.BlockSpec((9, Cpad, Coutp), lambda n: (0, 0, 0)),
            pl.BlockSpec((1, Coutp), lambda n: (0, 0)),
        ],
        out_specs=pl.BlockSpec((1, Ho, Wo, Coutp), lambda n: (n, 0, 0, 0)),
        compiler_params=pltpu.CompilerParams(
            dimension_semantics=("parallel",),
            vmem_limit_bytes=_vmem_limit(vmem_est)),
        cost_estimate=cost,
    )(xin, wt, bt)


# --------------------------------- glue ------------------------------------ #
def fold_bn(bn):
    gamma, beta, mean, var = bn
    scale = gamma / jnp.sqrt(var + EPS)
    bias = beta - mean * scale
    return scale, bias


def w1x1_mat(w_oihw, scale, in_pad=None, out_pad=None):
    # (Cout, Cin, 1, 1) -> (Cin, Cout), BN scale folded, zero-padded
    Cout, Cin = w_oihw.shape[:2]
    m = w_oihw.reshape(Cout, Cin).T * scale[None, :]
    ip = in_pad if in_pad is not None else Cin
    op = out_pad if out_pad is not None else Cout
    return jnp.pad(m, ((0, ip - Cin), (0, op - Cout)))


def bottleneck_forward(x_nchw, params, stride, compute_dtype=jnp.bfloat16):
    cd = compute_dtype
    x = jnp.transpose(x_nchw, (0, 2, 3, 1))  # NCHW -> NHWC
    # TODO(synk): the NCHW<->NHWC transposes and the strided shortcut slice are
    #             HBM copies in glue; a caller supplying NHWC would avoid them.
    N, H, W, Cin = x.shape
    planes = params["w1"].shape[0]
    expc = params["w3"].shape[0]
    Ho = (H - 1) // stride + 1
    Wo = (W - 1) // stride + 1
    Pp = _round_up(planes, 128)   # lane-dense intermediate channel count
    Cp = _round_up(expc, 128)

    # stage 1: 1x1 conv + bn1 + relu  (scale folded into W, lane-dense out)
    s1, b1 = fold_bn(params["bn1"])
    W1 = w1x1_mat(params["w1"], s1, out_pad=Pp)
    b1p = jnp.pad(b1, (0, Pp - planes))
    y1 = fused_matmul(x.reshape(N * H * W, Cin).astype(cd), W1.astype(cd), b1p,
                      apply_relu=True, out_dtype=cd)
    y1 = y1.reshape(N, H, W, Pp)
    # TODO(synk): fusing this GEMM into the 3x3 kernel per row-strip would
    #             remove the y1 HBM round trip entirely.

    # stage 2: 3x3 conv (stride, pad=1) + bn2 + relu (in-kernel 9-tap reduce)
    s2, b2 = fold_bn(params["bn2"])
    y2 = conv3x3_bn_relu(y1, params["w2"], s2, b2, stride, cd)  # (N,Ho,Wo,Pp)
    h2d = y2.reshape(N * Ho * Wo, Pp)

    # stage 3: 1x1 conv + bn3, fused with the shortcut branch + add + relu
    s3, b3 = fold_bn(params["bn3"])
    W3 = w1x1_mat(params["w3"], s3, in_pad=Pp, out_pad=Cp)
    b3p = jnp.pad(b3, (0, Cp - expc))
    if "w_sc" in params:
        ssc, bsc = fold_bn(params["bn_sc"])
        Wsc = w1x1_mat(params["w_sc"], ssc, out_pad=Cp)
        bscp = jnp.pad(bsc, (0, Cp - expc))
        x_s = x[:, ::stride, ::stride, :].reshape(N * Ho * Wo, Cin)
        out2d = fused_matmul(h2d, W3.astype(cd), b3p + bscp,
                             apply_relu=True, out_dtype=x.dtype,
                             gemm2=(x_s.astype(cd), Wsc.astype(cd)))
    else:
        assert stride == 1 and Cin == expc
        res = x.reshape(N * H * W, Cin)            # residual stays in f32
        out2d = fused_matmul(h2d, W3.astype(cd), b3p,
                             apply_relu=True, out_dtype=x.dtype,
                             residual=res)
    out = out2d[:, :expc].reshape(N, Ho, Wo, expc)
    return jnp.transpose(out, (0, 3, 1, 2))  # back to NCHW


# -------------------------- pure-JAX reference ------------------------------ #
def ref_forward(x_nchw, params, stride):
    x = jnp.transpose(x_nchw, (0, 2, 3, 1))

    def conv(x, w_oihw, s=1, pad=0):
        w = jnp.transpose(w_oihw, (2, 3, 1, 0))
        return jax.lax.conv_general_dilated(
            x, w, (s, s), [(pad, pad), (pad, pad)],
            dimension_numbers=("NHWC", "HWIO", "NHWC"))

    def bn(x, p):
        g, b, m, v = p
        return (x - m) / jnp.sqrt(v + EPS) * g + b

    out = jax.nn.relu(bn(conv(x, params["w1"]), params["bn1"]))
    out = jax.nn.relu(bn(conv(out, params["w2"], s=stride, pad=1), params["bn2"]))
    out = bn(conv(out, params["w3"]), params["bn3"])
    if "w_sc" in params:
        sc = bn(conv(x, params["w_sc"], s=stride), params["bn_sc"])
    else:
        sc = x
    return jnp.transpose(jax.nn.relu(out + sc), (0, 3, 1, 2))


# --------------------------------- main ------------------------------------- #
if __name__ == "__main__":
    expansion = 4
    root = jax.random.PRNGKey(0)

    def bn_params(k, c):
        k1, k2, k3, k4 = jax.random.split(k, 4)
        return (jax.random.uniform(k1, (c,), jnp.float32, 0.5, 1.5),
                jax.random.normal(k2, (c,), jnp.float32) * 0.1,
                jax.random.normal(k3, (c,), jnp.float32) * 0.1,
                jax.random.uniform(k4, (c,), jnp.float32, 0.5, 1.5))

    def make_case(key, in_planes, planes, stride):
        keys = jax.random.split(key, 9)
        p = {
            "w1": jax.random.normal(keys[0], (planes, in_planes, 1, 1), jnp.float32) * 0.1,
            "bn1": bn_params(keys[1], planes),
            "w2": jax.random.normal(keys[2], (planes, planes, 3, 3), jnp.float32) * 0.1,
            "bn2": bn_params(keys[3], planes),
            "w3": jax.random.normal(keys[4], (expansion * planes, planes, 1, 1), jnp.float32) * 0.1,
            "bn3": bn_params(keys[5], expansion * planes),
        }
        if stride != 1 or in_planes != expansion * planes:
            p["w_sc"] = jax.random.normal(
                keys[6], (expansion * planes, in_planes, 1, 1), jnp.float32) * 0.1
            p["bn_sc"] = bn_params(keys[7], expansion * planes)
        x = jax.random.normal(keys[8], (2, in_planes, 16, 16), jnp.float32)
        return x, p

    k1, k2 = jax.random.split(root)
    cases = [
        ("proj_stride2", *make_case(k1, 16, 8, 2), 2),      # projection shortcut
        ("identity_stride1", *make_case(k2, 32, 8, 1), 1),  # identity shortcut
    ]

    for name, x, params, stride in cases:
        ref = ref_forward(x, params, stride)

        # tight check: f32 compute path
        out = jax.block_until_ready(
            bottleneck_forward(x, params, stride, compute_dtype=jnp.float32))
        assert out.shape == ref.shape, (name, out.shape, ref.shape)
        err = float(jnp.max(jnp.abs(out - ref)))
        assert jnp.allclose(out, ref, rtol=2e-3, atol=2e-3), (name, err)

        # default path: bf16 activations/weights with f32 accumulation
        out_bf = jax.block_until_ready(bottleneck_forward(x, params, stride))
        err_bf = float(jnp.max(jnp.abs(out_bf.astype(jnp.float32) - ref)))
        assert jnp.allclose(out_bf.astype(jnp.float32), ref,
                            rtol=1e-1, atol=1e-1), (name, err_bf)

    print("KERNEL_OK")
</pallas_src>

<mosaic_0001>
module attributes {stable_mosaic.version = 11 : i64} {
  func.func @_mm_kernel(%arg0: i32, %arg1: i32, %arg2: memref<512x128xf32, #tpu.memory_space<vmem>>, %arg3: memref<128x128xf32, #tpu.memory_space<vmem>>, %arg4: memref<1x128xf32, #tpu.memory_space<vmem>>, %arg5: memref<512x128xf32, #tpu.memory_space<vmem>>) attributes {dimension_semantics = [#tpu.dimension_semantics<parallel>, #tpu.dimension_semantics<parallel>], iteration_bounds = array<i64: 1, 1>, scalar_prefetch = 0 : i64, scratch_operands = 0 : i64, tpu.core_type = #tpu.core_type<tc>, window_params = [{transform_indices = @transform_0, window_bounds = array<i64: 512, 128>}, {transform_indices = @transform_1, window_bounds = array<i64: 128, 128>}, {transform_indices = @transform_2, window_bounds = array<i64: 1, 128>}, {transform_indices = @transform_3, window_bounds = array<i64: 512, 128>}]} {
    %c0 = arith.constant 0 : index
    %c0_0 = arith.constant 0 : index
    %0 = vector.load %arg2[%c0, %c0_0] : memref<512x128xf32, #tpu.memory_space<vmem>>, vector<512x128xf32>
    %c0_1 = arith.constant 0 : index
    %c0_2 = arith.constant 0 : index
    %1 = vector.load %arg3[%c0_1, %c0_2] : memref<128x128xf32, #tpu.memory_space<vmem>>, vector<128x128xf32>
    %cst = arith.constant dense<0.000000e+00> : vector<512x128xf32>
    %2 = tpu.matmul %0, %1, %cst {dimension_numbers = #tpu.dot_dimension_numbers<[1], [0], [0], [1], [0, 0, 1, 1], [], []>} : vector<512x128xf32>, vector<128x128xf32>, vector<512x128xf32> -> vector<512x128xf32>
    %c0_3 = arith.constant 0 : index
    %c0_4 = arith.constant 0 : index
    %3 = vector.load %arg4[%c0_3, %c0_4] : memref<1x128xf32, #tpu.memory_space<vmem>>, vector<1x128xf32>
    %4 = vector.broadcast %3 : vector<1x128xf32> to vector<512x128xf32>
    %5 = arith.addf %2, %4 : vector<512x128xf32>
    %cst_5 = arith.constant 0.000000e+00 : f32
    %6 = vector.broadcast %cst_5 : f32 to vector<512x128xf32>
    %7 = arith.maximumf %5, %6 : vector<512x128xf32>
    %c0_6 = arith.constant 0 : index
    %c0_7 = arith.constant 0 : index
    %8 = vector.load %arg5[%c0_6, %c0_7] : memref<512x128xf32, #tpu.memory_space<vmem>>, vector<512x128xf32>
    tpu.vector_store %arg5[%c0_6, %c0_7], %7 {strides = array<i32>} : memref<512x128xf32, #tpu.memory_space<vmem>>, vector<512x128xf32>,
    return
  }
  func.func @transform_0(%arg0: i32, %arg1: i32) -> (i32, i32) {
    %c0_i32 = arith.constant 0 : i32
    %c0_i32_0 = arith.constant 0 : i32
    return %arg0, %c0_i32 : i32, i32
  }
  func.func @transform_1(%arg0: i32, %arg1: i32) -> (i32, i32) {
    %c0_i32 = arith.constant 0 : i32
    %c0_i32_0 = arith.constant 0 : i32
    return %c0_i32, %arg1 : i32, i32
  }
  func.func @transform_2(%arg0: i32, %arg1: i32) -> (i32, i32) {
    %c0_i32 = arith.constant 0 : i32
    %c0_i32_0 = arith.constant 0 : i32
    return %c0_i32, %arg1 : i32, i32
  }
  func.func @transform_3(%arg0: i32, %arg1: i32) -> (i32, i32) {
    %c0_i32 = arith.constant 0 : i32
    return %arg0, %arg1 : i32, i32
  }
}

</mosaic_0001>

<llo_original>
// kernel: tpu_custom_call.1
$region0: #{tpu_custom_call.1}
  #allocation0 [shape = 'u32[]', space=smem, size = 0x4, offset = 0x4, fixed_abs, tag = 'smem constant byte address 0x4 - core index']
  #allocation1 [shape = 'u32[72,128]{1,0:T(1,128)}', space=vmem, size = 0x9000, scoped, tag = 'internal scratch']
  %s0 = inlined_call_operand.hbm [shape: f32[512,128], index: 0, kind: input, shape index: {}]
  %s1 = inlined_call_operand.hbm [shape: f32[128,128], index: 1, kind: input, shape index: {}]
  %s2 = inlined_call_operand.vmem [shape: f32[1,128], index: 2, kind: input, shape index: {}]
  %s3 = inlined_call_operand.hbm [shape: f32[512,128], index: 3, kind: output, shape index: {}]
  %s4 = sld [smem:[#allocation0]]
  $region30: #{tpu_custom_call.1} parent=0
    _
  %s6 = ssub.s32 1, %s4
  %s7 = scalar_select 0, %s6, %s4
  $region1: #{tpu_custom_call.1} parent=0
    #allocation2 [shape = 'u8[262144]{0}', space=vmem, size = 0x40000, scoped, tag = 'input window, operand 0, single buffered']
    #allocation3 [shape = 's32[1]{0}', space=sflag, size = 0x4, scoped, tag = 'scoped memory for tpu_custom_call.1']
    #allocation4 [shape = 's32[1]{0}', space=sflag, size = 0x4, scoped, tag = 'scoped memory for tpu_custom_call.1']
    #allocation5 [shape = 'u8[65536]{0}', space=vmem, size = 0x10000, scoped, tag = 'input window, operand 1, single buffered']
    #allocation6 [shape = 's32[1]{0}', space=sflag, size = 0x4, scoped, tag = 'scoped memory for tpu_custom_call.1']
    #allocation7 [shape = 'u8[262144]{0}', space=vmem, size = 0x40000, scoped, tag = 'output window, operand 0, single buffered']
    %8 = vsyncpa [#allocation3], 0
    %9 = vsyncpa [#allocation6], 0
    %10 = vsyncpa [#allocation4], 0
    // Predicated region
    $region2: #{tpu_custom_call.1} parent=1 // pred_check
      _
    $region3: #{tpu_custom_call.1} parent=1 // pred_check_branch
      %12 = sbr.rel (0) target = $region5
    $region4: #{tpu_custom_call.1} parent=1 // pred_region
      %14 = vsyncadd [#allocation3], 0
      %s15 = sshll.u32 %s0, 4
      %s16 = int_to_ptr.hbm [resolvable:$true] %s15
      %s17 = sshll.u32 [#allocation2], 4
      %s18 = int_to_ptr.vmem [resolvable:$true] %s17
      %23 = dma.hbm_to_vmem [thread:$0]  %s16, 8192, %s18, [#allocation3], 128, 128, 8
    $region5: #{tpu_custom_call.1} parent=1 // pred_fallthru
      _
    // Predicated region
    $region6: #{tpu_custom_call.1} parent=1 // pred_check
      _
    $region7: #{tpu_custom_call.1} parent=1 // pred_check_branch
      %25 = sbr.rel (0) target = $region9
    $region8: #{tpu_custom_call.1} parent=1 // pred_region
      %27 = vsyncadd [#allocation6], 0
      %s28 = sshll.u32 %s1, 4
      %s29 = int_to_ptr.hbm [resolvable:$true] %s28
      %s30 = sshll.u32 [#allocation5], 4
      %s31 = int_to_ptr.vmem [resolvable:$true] %s30
      %36 = dma.hbm_to_vmem [thread:$0]  %s29, 2048, %s31, [#allocation6], 128, 128, 8
    $region9: #{tpu_custom_call.1} parent=1 // pred_fallthru
      _
    // Predicated region
    $region10: #{tpu_custom_call.1} parent=1 // pred_check
      _
    $region11: #{tpu_custom_call.1} parent=1 // pred_check_branch
      %38 = sbr.rel (0) target = $region13
    $region12: #{tpu_custom_call.1} parent=1 // pred_region
      _
    $region13: #{tpu_custom_call.1} parent=1 // pred_fallthru
      _
    // Predicated region
    $region14: #{tpu_custom_call.1} parent=1 // pred_check
      _
    $region15: #{tpu_custom_call.1} parent=1 // pred_check_branch
      %40 = sbr.rel (0) target = $region17
    $region16: #{tpu_custom_call.1} parent=1 // pred_region
      %42 = dma.done [#allocation3], 8192
    $region17: #{tpu_custom_call.1} parent=1 // pred_fallthru
      _
    // Predicated region
    $region18: #{tpu_custom_call.1} parent=1 // pred_check
      _
    $region19: #{tpu_custom_call.1} parent=1 // pred_check_branch
      %44 = sbr.rel (0) target = $region21
    $region20: #{tpu_custom_call.1} parent=1 // pred_region
      %46 = dma.done [#allocation6], 2048
    $region21: #{tpu_custom_call.1} parent=1 // pred_fallthru
      _
    %v47 = vld [vmem:[#allocation2] sm:$0xff]
    %v48 = vld [vmem:[#allocation2 + $0x8] sm:$0xff]
    %v49 = vld [vmem:[#allocation2 + $0x10] sm:$0xff]
    %v50 = vld [vmem:[#allocation2 + $0x18] sm:$0xff]
    %v51 = vld [vmem:[#allocation2 + $0x20] sm:$0xff]
    %v52 = vld [vmem:[#allocation2 + $0x28] sm:$0xff]
    %v53 = vld [vmem:[#allocation2 + $0x30] sm:$0xff]
    %v54 = vld [vmem:[#allocation2 + $0x38] sm:$0xff]
    %v55 = vld [vmem:[#allocation2 + $0x40] sm:$0xff]
    %v56 = vld [vmem:[#allocation2 + $0x48] sm:$0xff]
    %v57 = vld [vmem:[#allocation2 + $0x50] sm:$0xff]
    %v58 = vld [vmem:[#allocation2 + $0x58] sm:$0xff]
    %v59 = vld [vmem:[#allocation2 + $0x60] sm:$0xff]
    %v60 = vld [vmem:[#allocation2 + $0x68] sm:$0xff]
    %v61 = vld [vmem:[#allocation2 + $0x70] sm:$0xff]
    %v62 = vld [vmem:[#allocation2 + $0x78] sm:$0xff]
    %v63 = vld [vmem:[#allocation2 + $0x80] sm:$0xff]
    %v64 = vld [vmem:[#allocation2 + $0x88] sm:$0xff]
    %v65 = vld [vmem:[#allocation2 + $0x90] sm:$0xff]
    %v66 = vld [vmem:[#allocation2 + $0x98] sm:$0xff]
    %v67 = vld [vmem:[#allocation2 + $0xa0] sm:$0xff]
    %v68 = vld [vmem:[#allocation2 + $0xa8] sm:$0xff]
    %v69 = vld [vmem:[#allocation2 + $0xb0] sm:$0xff]
    %v70 = vld [vmem:[#allocation2 + $0xb8] sm:$0xff]
    %v71 = vld [vmem:[#allocation2 + $0xc0] sm:$0xff]
    %v72 = vld [vmem:[#allocation2 + $0xc8] sm:$0xff]
    %v73 = vld [vmem:[#allocation2 + $0xd0] sm:$0xff]
    %v74 = vld [vmem:[#allocation2 + $0xd8] sm:$0xff]
    %v75 = vld [vmem:[#allocation2 + $0xe0] sm:$0xff]
    %v76 = vld [vmem:[#allocation2 + $0xe8] sm:$0xff]
    %v77 = vld [vmem:[#allocation2 + $0xf0] sm:$0xff]
    %v78 = vld [vmem:[#allocation2 + $0xf8] sm:$0xff]
    %v79 = vld [vmem:[#allocation2 + $0x100] sm:$0xff]
    %v80 = vld [vmem:[#allocation2 + $0x108] sm:$0xff]
    %v81 = vld [vmem:[#allocation2 + $0x110] sm:$0xff]
    %v82 = vld [vmem:[#allocation2 + $0x118] sm:$0xff]
    %v83 = vld [vmem:[#allocation2 + $0x120] sm:$0xff]
    %v84 = vld [vmem:[#allocation2 + $0x128] sm:$0xff]
    %v85 = vld [vmem:[#allocation2 + $0x130] sm:$0xff]
    %v86 = vld [vmem:[#allocation2 + $0x138] sm:$0xff]
    %v87 = vld [vmem:[#allocation2 + $0x140] sm:$0xff]
    %v88 = vld [vmem:[#allocation2 + $0x148] sm:$0xff]
    %v89 = vld [vmem:[#allocation2 + $0x150] sm:$0xff]
    %v90 = vld [vmem:[#allocation2 + $0x158] sm:$0xff]
    %v91 = vld [vmem:[#allocation2 + $0x160] sm:$0xff]
    %v92 = vld [vmem:[#allocation2 + $0x168] sm:$0xff]
    %v93 = vld [vmem:[#allocation2 + $0x170] sm:$0xff]
    %v94 = vld [vmem:[#allocation2 + $0x178] sm:$0xff]
    %v95 = vld [vmem:[#allocation2 + $0x180] sm:$0xff]
    %v96 = vld [vmem:[#allocation2 + $0x188] sm:$0xff]
    %v97 = vld [vmem:[#allocation2 + $0x190] sm:$0xff]
    %v98 = vld [vmem:[#allocation2 + $0x198] sm:$0xff]
    %v99 = vld [vmem:[#allocation2 + $0x1a0] sm:$0xff]
    %v100 = vld [vmem:[#allocation2 + $0x1a8] sm:$0xff]
    %v101 = vld [vmem:[#allocation2 + $0x1b0] sm:$0xff]
    %v102 = vld [vmem:[#allocation2 + $0x1b8] sm:$0xff]
    %v103 = vld [vmem:[#allocation2 + $0x1c0] sm:$0xff]
    %v104 = vld [vmem:[#allocation2 + $0x1c8] sm:$0xff]
    %v105 = vld [vmem:[#allocation2 + $0x1d0] sm:$0xff]
    %v106 = vld [vmem:[#allocation2 + $0x1d8] sm:$0xff]
    %v107 = vld [vmem:[#allocation2 + $0x1e0] sm:$0xff]
    %v108 = vld [vmem:[#allocation2 + $0x1e8] sm:$0xff]
    %v109 = vld [vmem:[#allocation2 + $0x1f0] sm:$0xff]
    %v110 = vld [vmem:[#allocation2 + $0x1f8] sm:$0xff]
    %v111 = vld [vmem:[#allocation5] sm:$0xff]
    %v112 = vld [vmem:[#allocation5 + $0x8] sm:$0xff]
    %v113 = vld [vmem:[#allocation5 + $0x10] sm:$0xff]
    %v114 = vld [vmem:[#allocation5 + $0x18] sm:$0xff]
    %v115 = vld [vmem:[#allocation5 + $0x20] sm:$0xff]
    %v116 = vld [vmem:[#allocation5 + $0x28] sm:$0xff]
    %v117 = vld [vmem:[#allocation5 + $0x30] sm:$0xff]
    %v118 = vld [vmem:[#allocation5 + $0x38] sm:$0xff]
    %v119 = vld [vmem:[#allocation5 + $0x40] sm:$0xff]
    %v120 = vld [vmem:[#allocation5 + $0x48] sm:$0xff]
    %v121 = vld [vmem:[#allocation5 + $0x50] sm:$0xff]
    %v122 = vld [vmem:[#allocation5 + $0x58] sm:$0xff]
    %v123 = vld [vmem:[#allocation5 + $0x60] sm:$0xff]
    %v124 = vld [vmem:[#allocation5 + $0x68] sm:$0xff]
    %v125 = vld [vmem:[#allocation5 + $0x70] sm:$0xff]
    %v126 = vld [vmem:[#allocation5 + $0x78] sm:$0xff]
    %v127 = vld [vmem:[%s2] sm:$0x1]
    %v129 = vperm.slane %v127, 0
    %131 = vmatpush.msra.mxu0 %v126
    %132 = vmatpush.msra.mxu0 %v125
    %133 = vmatpush.msra.mxu0 %v124
    %134 = vmatpush.msra.mxu0 %v123
    %135 = vmatpush.msra.mxu0 %v122
    %136 = vmatpush.msra.mxu0 %v121
    %137 = vmatpush.msra.mxu0 %v120
    %138 = vmatpush.msra.mxu0 %v119
    %139 = vmatpush.msra.mxu0 %v118
    %140 = vmatpush.msra.mxu0 %v117
    %141 = vmatpush.msra.mxu0 %v116
    %142 = vmatpush.msra.mxu0 %v115
    %143 = vmatpush.msra.mxu0 %v114
    %144 = vmatpush.msra.mxu0 %v113
    %145 = vmatpush.msra.mxu0 %v112
    %146 = vmatpush.msra.mxu0 %v111
    %147 = vmatmul.f32.gmra.mxu0 %v47
    %v148 = vpop.f32.mrf.mxu0
    %v149 = vadd.f32 %v129, %v148
    %150 = vmatmul.f32.gmra.mxu0 %v48
    %v151 = vpop.f32.mrf.mxu0
    %v152 = vadd.f32 %v129, %v151
    %153 = vmatmul.f32.gmra.mxu0 %v49
    %v154 = vpop.f32.mrf.mxu0
    %v155 = vadd.f32 %v129, %v154
    %156 = vmatmul.f32.gmra.mxu0 %v50
    %v157 = vpop.f32.mrf.mxu0
    %v158 = vadd.f32 %v129, %v157
    %159 = vmatmul.f32.gmra.mxu0 %v51
    %v160 = vpop.f32.mrf.mxu0
    %v161 = vadd.f32 %v129, %v160
    %162 = vmatmul.f32.gmra.mxu0 %v52
    %v163 = vpop.f32.mrf.mxu0
    %v164 = vadd.f32 %v129, %v163
    %165 = vmatmul.f32.gmra.mxu0 %v53
    %v166 = vpop.f32.mrf.mxu0
    %v167 = vadd.f32 %v129, %v166
    %168 = vmatmul.f32.gmra.mxu0 %v54
    %v169 = vpop.f32.mrf.mxu0
    %v170 = vadd.f32 %v129, %v169
    %171 = vmatmul.f32.gmra.mxu0 %v55
    %v172 = vpop.f32.mrf.mxu0
    %v173 = vadd.f32 %v129, %v172
    %174 = vmatmul.f32.gmra.mxu0 %v56
    %v175 = vpop.f32.mrf.mxu0
    %v176 = vadd.f32 %v129, %v175
    %177 = vmatmul.f32.gmra.mxu0 %v57
    %v178 = vpop.f32.mrf.mxu0
    %v179 = vadd.f32 %v129, %v178
    %180 = vmatmul.f32.gmra.mxu0 %v58
    %v181 = vpop.f32.mrf.mxu0
    %v182 = vadd.f32 %v129, %v181
    %183 = vmatmul.f32.gmra.mxu0 %v59
    %v184 = vpop.f32.mrf.mxu0
    %v185 = vadd.f32 %v129, %v184
    %186 = vmatmul.f32.gmra.mxu0 %v60
    %v187 = vpop.f32.mrf.mxu0
    %v188 = vadd.f32 %v129, %v187
    %189 = vmatmul.f32.gmra.mxu0 %v61
    %v190 = vpop.f32.mrf.mxu0
    %v191 = vadd.f32 %v129, %v190
    %192 = vmatmul.f32.gmra.mxu0 %v62
    %v193 = vpop.f32.mrf.mxu0
    %v194 = vadd.f32 %v129, %v193
    %195 = vmatmul.f32.gmra.mxu0 %v63
    %v196 = vpop.f32.mrf.mxu0
    %v197 = vadd.f32 %v129, %v196
    %198 = vmatmul.f32.gmra.mxu0 %v64
    %v199 = vpop.f32.mrf.mxu0
    %v200 = vadd.f32 %v129, %v199
    %201 = vmatmul.f32.gmra.mxu0 %v65
    %v202 = vpop.f32.mrf.mxu0
    %v203 = vadd.f32 %v129, %v202
    %204 = vmatmul.f32.gmra.mxu0 %v66
    %v205 = vpop.f32.mrf.mxu0
    %v206 = vadd.f32 %v129, %v205
    %207 = vmatmul.f32.gmra.mxu0 %v67
    %v208 = vpop.f32.mrf.mxu0
    %v209 = vadd.f32 %v129, %v208
    %210 = vmatmul.f32.gmra.mxu0 %v68
    %v211 = vpop.f32.mrf.mxu0
    %v212 = vadd.f32 %v129, %v211
    %213 = vmatmul.f32.gmra.mxu0 %v69
    %v214 = vpop.f32.mrf.mxu0
    %v215 = vadd.f32 %v129, %v214
    %216 = vmatmul.f32.gmra.mxu0 %v70
    %v217 = vpop.f32.mrf.mxu0
    %v218 = vadd.f32 %v129, %v217
    %219 = vmatmul.f32.gmra.mxu0 %v71
    %v220 = vpop.f32.mrf.mxu0
    %v221 = vadd.f32 %v129, %v220
    %222 = vmatmul.f32.gmra.mxu0 %v72
    %v223 = vpop.f32.mrf.mxu0
    %v224 = vadd.f32 %v129, %v223
    %225 = vmatmul.f32.gmra.mxu0 %v73
    %v226 = vpop.f32.mrf.mxu0
    %v227 = vadd.f32 %v129, %v226
    %228 = vmatmul.f32.gmra.mxu0 %v74
    %v229 = vpop.f32.mrf.mxu0
    %v230 = vadd.f32 %v129, %v229
    %231 = vmatmul.f32.gmra.mxu0 %v75
    %v232 = vpop.f32.mrf.mxu0
    %v233 = vadd.f32 %v129, %v232
    %234 = vmatmul.f32.gmra.mxu0 %v76
    %v235 = vpop.f32.mrf.mxu0
    %v236 = vadd.f32 %v129, %v235
    %237 = vmatmul.f32.gmra.mxu0 %v77
    %v238 = vpop.f32.mrf.mxu0
    %v239 = vadd.f32 %v129, %v238
    %240 = vmatmul.f32.gmra.mxu0 %v78
    %v241 = vpop.f32.mrf.mxu0
    %v242 = vadd.f32 %v129, %v241
    %243 = vmatmul.f32.gmra.mxu0 %v79
    %v244 = vpop.f32.mrf.mxu0
    %v245 = vadd.f32 %v129, %v244
    %246 = vmatmul.f32.gmra.mxu0 %v80
    %v247 = vpop.f32.mrf.mxu0
    %v248 = vadd.f32 %v129, %v247
    %249 = vmatmul.f32.gmra.mxu0 %v81
    %v250 = vpop.f32.mrf.mxu0
    %v251 = vadd.f32 %v129, %v250
    %252 = vmatmul.f32.gmra.mxu0 %v82
    %v253 = vpop.f32.mrf.mxu0
    %v254 = vadd.f32 %v129, %v253
    %255 = vmatmul.f32.gmra.mxu0 %v83
    %v256 = vpop.f32.mrf.mxu0
    %v257 = vadd.f32 %v129, %v256
    %258 = vmatmul.f32.gmra.mxu0 %v84
    %v259 = vpop.f32.mrf.mxu0
    %v260 = vadd.f32 %v129, %v259
    %261 = vmatmul.f32.gmra.mxu0 %v85
    %v262 = vpop.f32.mrf.mxu0
    %v263 = vadd.f32 %v129, %v262
    %264 = vmatmul.f32.gmra.mxu0 %v86
    %v265 = vpop.f32.mrf.mxu0
    %v266 = vadd.f32 %v129, %v265
    %267 = vmatmul.f32.gmra.mxu0 %v87
    %v268 = vpop.f32.mrf.mxu0
    %v269 = vadd.f32 %v129, %v268
    %270 = vmatmul.f32.gmra.mxu0 %v88
    %v271 = vpop.f32.mrf.mxu0
    %v272 = vadd.f32 %v129, %v271
    %273 = vmatmul.f32.gmra.mxu0 %v89
    %v274 = vpop.f32.mrf.mxu0
    %v275 = vadd.f32 %v129, %v274
    %276 = vmatmul.f32.gmra.mxu0 %v90
    %v277 = vpop.f32.mrf.mxu0
    %v278 = vadd.f32 %v129, %v277
    %279 = vmatmul.f32.gmra.mxu0 %v91
    %v280 = vpop.f32.mrf.mxu0
    %v281 = vadd.f32 %v129, %v280
    %282 = vmatmul.f32.gmra.mxu0 %v92
    %v283 = vpop.f32.mrf.mxu0
    %v284 = vadd.f32 %v129, %v283
    %285 = vmatmul.f32.gmra.mxu0 %v93
    %v286 = vpop.f32.mrf.mxu0
    %v287 = vadd.f32 %v129, %v286
    %288 = vmatmul.f32.gmra.mxu0 %v94
    %v289 = vpop.f32.mrf.mxu0
    %v290 = vadd.f32 %v129, %v289
    %291 = vmatmul.f32.gmra.mxu0 %v95
    %v292 = vpop.f32.mrf.mxu0
    %v293 = vadd.f32 %v129, %v292
    %294 = vmatmul.f32.gmra.mxu0 %v96
    %v295 = vpop.f32.mrf.mxu0
    %v296 = vadd.f32 %v129, %v295
    %297 = vmatmul.f32.gmra.mxu0 %v97
    %v298 = vpop.f32.mrf.mxu0
    %v299 = vadd.f32 %v129, %v298
    %300 = vmatmul.f32.gmra.mxu0 %v98
    %v301 = vpop.f32.mrf.mxu0
    %v302 = vadd.f32 %v129, %v301
    %303 = vmatmul.f32.gmra.mxu0 %v99
    %v304 = vpop.f32.mrf.mxu0
    %v305 = vadd.f32 %v129, %v304
    %306 = vmatmul.f32.gmra.mxu0 %v100
    %v307 = vpop.f32.mrf.mxu0
    %v308 = vadd.f32 %v129, %v307
    %309 = vmatmul.f32.gmra.mxu0 %v101
    %v310 = vpop.f32.mrf.mxu0
    %v311 = vadd.f32 %v129, %v310
    %312 = vmatmul.f32.gmra.mxu0 %v102
    %v313 = vpop.f32.mrf.mxu0
    %v314 = vadd.f32 %v129, %v313
    %315 = vmatmul.f32.gmra.mxu0 %v103
    %v316 = vpop.f32.mrf.mxu0
    %v317 = vadd.f32 %v129, %v316
    %318 = vmatmul.f32.gmra.mxu0 %v104
    %v319 = vpop.f32.mrf.mxu0
    %v320 = vadd.f32 %v129, %v319
    %321 = vmatmul.f32.gmra.mxu0 %v105
    %v322 = vpop.f32.mrf.mxu0
    %v323 = vadd.f32 %v129, %v322
    %324 = vmatmul.f32.gmra.mxu0 %v106
    %v325 = vpop.f32.mrf.mxu0
    %v326 = vadd.f32 %v129, %v325
    %327 = vmatmul.f32.gmra.mxu0 %v107
    %v328 = vpop.f32.mrf.mxu0
    %v329 = vadd.f32 %v129, %v328
    %330 = vmatmul.f32.gmra.mxu0 %v108
    %v331 = vpop.f32.mrf.mxu0
    %v332 = vadd.f32 %v129, %v331
    %333 = vmatmul.f32.gmra.mxu0 %v109
    %v334 = vpop.f32.mrf.mxu0
    %v335 = vadd.f32 %v129, %v334
    %336 = vmatmul.f32.gmra.mxu0 %v110
    %v337 = vpop.f32.mrf.mxu0
    %v338 = vadd.f32 %v129, %v337
    %339 = vdwg.mxu0
    %v340 = vmax.f32 %v149, 0.0
    %v341 = vmax.f32 %v152, 0.0
    %v342 = vmax.f32 %v155, 0.0
    %v343 = vmax.f32 %v158, 0.0
    %v344 = vmax.f32 %v161, 0.0
    %v345 = vmax.f32 %v164, 0.0
    %v346 = vmax.f32 %v167, 0.0
    %v347 = vmax.f32 %v170, 0.0
    %v348 = vmax.f32 %v173, 0.0
    %v349 = vmax.f32 %v176, 0.0
    %v350 = vmax.f32 %v179, 0.0
    %v351 = vmax.f32 %v182, 0.0
    %v352 = vmax.f32 %v185, 0.0
    %v353 = vmax.f32 %v188, 0.0
    %v354 = vmax.f32 %v191, 0.0
    %v355 = vmax.f32 %v194, 0.0
    %v356 = vmax.f32 %v197, 0.0
    %v357 = vmax.f32 %v200, 0.0
    %v358 = vmax.f32 %v203, 0.0
    %v359 = vmax.f32 %v206, 0.0
    %v360 = vmax.f32 %v209, 0.0
    %v361 = vmax.f32 %v212, 0.0
    %v362 = vmax.f32 %v215, 0.0
    %v363 = vmax.f32 %v218, 0.0
    %v364 = vmax.f32 %v221, 0.0
    %v365 = vmax.f32 %v224, 0.0
    %v366 = vmax.f32 %v227, 0.0
    %v367 = vmax.f32 %v230, 0.0
    %v368 = vmax.f32 %v233, 0.0
    %v369 = vmax.f32 %v236, 0.0
    %v370 = vmax.f32 %v239, 0.0
    %v371 = vmax.f32 %v242, 0.0
    %v372 = vmax.f32 %v245, 0.0
    %v373 = vmax.f32 %v248, 0.0
    %v374 = vmax.f32 %v251, 0.0
    %v375 = vmax.f32 %v254, 0.0
    %v376 = vmax.f32 %v257, 0.0
    %v377 = vmax.f32 %v260, 0.0
    %v378 = vmax.f32 %v263, 0.0
    %v379 = vmax.f32 %v266, 0.0
    %v380 = vmax.f32 %v269, 0.0
    %v381 = vmax.f32 %v272, 0.0
    %v382 = vmax.f32 %v275, 0.0
    %v383 = vmax.f32 %v278, 0.0
    %v384 = vmax.f32 %v281, 0.0
    %v385 = vmax.f32 %v284, 0.0
    %v386 = vmax.f32 %v287, 0.0
    %v387 = vmax.f32 %v290, 0.0
    %v388 = vmax.f32 %v293, 0.0
    %v389 = vmax.f32 %v296, 0.0
    %v390 = vmax.f32 %v299, 0.0
    %v391 = vmax.f32 %v302, 0.0
    %v392 = vmax.f32 %v305, 0.0
    %v393 = vmax.f32 %v308, 0.0
    %v394 = vmax.f32 %v311, 0.0
    %v395 = vmax.f32 %v314, 0.0
    %v396 = vmax.f32 %v317, 0.0
    %v397 = vmax.f32 %v320, 0.0
    %v398 = vmax.f32 %v323, 0.0
    %v399 = vmax.f32 %v326, 0.0
    %v400 = vmax.f32 %v329, 0.0
    %v401 = vmax.f32 %v332, 0.0
    %v402 = vmax.f32 %v335, 0.0
    %v403 = vmax.f32 %v338, 0.0
    %404 = vst [vmem:[#allocation7] sm:$0xff] %v340
    %405 = vst [vmem:[#allocation7 + $0x8] sm:$0xff] %v341
    %406 = vst [vmem:[#allocation7 + $0x10] sm:$0xff] %v342
    %407 = vst [vmem:[#allocation7 + $0x18] sm:$0xff] %v343
    %408 = vst [vmem:[#allocation7 + $0x20] sm:$0xff] %v344
    %409 = vst [vmem:[#allocation7 + $0x28] sm:$0xff] %v345
    %410 = vst [vmem:[#allocation7 + $0x30] sm:$0xff] %v346
    %411 = vst [vmem:[#allocation7 + $0x38] sm:$0xff] %v347
    %412 = vst [vmem:[#allocation7 + $0x40] sm:$0xff] %v348
    %413 = vst [vmem:[#allocation7 + $0x48] sm:$0xff] %v349
    %414 = vst [vmem:[#allocation7 + $0x50] sm:$0xff] %v350
    %415 = vst [vmem:[#allocation7 + $0x58] sm:$0xff] %v351
    %416 = vst [vmem:[#allocation7 + $0x60] sm:$0xff] %v352
    %417 = vst [vmem:[#allocation7 + $0x68] sm:$0xff] %v353
    %418 = vst [vmem:[#allocation7 + $0x70] sm:$0xff] %v354
    %419 = vst [vmem:[#allocation7 + $0x78] sm:$0xff] %v355
    %420 = vst [vmem:[#allocation7 + $0x80] sm:$0xff] %v356
    %421 = vst [vmem:[#allocation7 + $0x88] sm:$0xff] %v357
    %422 = vst [vmem:[#allocation7 + $0x90] sm:$0xff] %v358
    %423 = vst [vmem:[#allocation7 + $0x98] sm:$0xff] %v359
    %424 = vst [vmem:[#allocation7 + $0xa0] sm:$0xff] %v360
    %425 = vst [vmem:[#allocation7 + $0xa8] sm:$0xff] %v361
    %426 = vst [vmem:[#allocation7 + $0xb0] sm:$0xff] %v362
    %427 = vst [vmem:[#allocation7 + $0xb8] sm:$0xff] %v363
    %428 = vst [vmem:[#allocation7 + $0xc0] sm:$0xff] %v364
    %429 = vst [vmem:[#allocation7 + $0xc8] sm:$0xff] %v365
    %430 = vst [vmem:[#allocation7 + $0xd0] sm:$0xff] %v366
    %431 = vst [vmem:[#allocation7 + $0xd8] sm:$0xff] %v367
    %432 = vst [vmem:[#allocation7 + $0xe0] sm:$0xff] %v368
    %433 = vst [vmem:[#allocation7 + $0xe8] sm:$0xff] %v369
    %434 = vst [vmem:[#allocation7 + $0xf0] sm:$0xff] %v370
    %435 = vst [vmem:[#allocation7 + $0xf8] sm:$0xff] %v371
    %436 = vst [vmem:[#allocation7 + $0x100] sm:$0xff] %v372
    %437 = vst [vmem:[#allocation7 + $0x108] sm:$0xff] %v373
    %438 = vst [vmem:[#allocation7 + $0x110] sm:$0xff] %v374
    %439 = vst [vmem:[#allocation7 + $0x118] sm:$0xff] %v375
    %440 = vst [vmem:[#allocation7 + $0x120] sm:$0xff] %v376
    %441 = vst [vmem:[#allocation7 + $0x128] sm:$0xff] %v377
    %442 = vst [vmem:[#allocation7 + $0x130] sm:$0xff] %v378
    %443 = vst [vmem:[#allocation7 + $0x138] sm:$0xff] %v379
    %444 = vst [vmem:[#allocation7 + $0x140] sm:$0xff] %v380
    %445 = vst [vmem:[#allocation7 + $0x148] sm:$0xff] %v381
    %446 = vst [vmem:[#allocation7 + $0x150] sm:$0xff] %v382
    %447 = vst [vmem:[#allocation7 + $0x158] sm:$0xff] %v383
    %448 = vst [vmem:[#allocation7 + $0x160] sm:$0xff] %v384
    %449 = vst [vmem:[#allocation7 + $0x168] sm:$0xff] %v385
    %450 = vst [vmem:[#allocation7 + $0x170] sm:$0xff] %v386
    %451 = vst [vmem:[#allocation7 + $0x178] sm:$0xff] %v387
    %452 = vst [vmem:[#allocation7 + $0x180] sm:$0xff] %v388
    %453 = vst [vmem:[#allocation7 + $0x188] sm:$0xff] %v389
    %454 = vst [vmem:[#allocation7 + $0x190] sm:$0xff] %v390
    %455 = vst [vmem:[#allocation7 + $0x198] sm:$0xff] %v391
    %456 = vst [vmem:[#allocation7 + $0x1a0] sm:$0xff] %v392
    %457 = vst [vmem:[#allocation7 + $0x1a8] sm:$0xff] %v393
    %458 = vst [vmem:[#allocation7 + $0x1b0] sm:$0xff] %v394
    %459 = vst [vmem:[#allocation7 + $0x1b8] sm:$0xff] %v395
    %460 = vst [vmem:[#allocation7 + $0x1c0] sm:$0xff] %v396
    %461 = vst [vmem:[#allocation7 + $0x1c8] sm:$0xff] %v397
    %462 = vst [vmem:[#allocation7 + $0x1d0] sm:$0xff] %v398
    %463 = vst [vmem:[#allocation7 + $0x1d8] sm:$0xff] %v399
    %464 = vst [vmem:[#allocation7 + $0x1e0] sm:$0xff] %v400
    %465 = vst [vmem:[#allocation7 + $0x1e8] sm:$0xff] %v401
    %466 = vst [vmem:[#allocation7 + $0x1f0] sm:$0xff] %v402
    %467 = vst [vmem:[#allocation7 + $0x1f8] sm:$0xff] %v403
    // Predicated region
    $region22: #{tpu_custom_call.1} parent=1 // pred_check
      _
    $region23: #{tpu_custom_call.1} parent=1 // pred_check_branch
      %469 = sbr.rel (0) target = $region25
    $region24: #{tpu_custom_call.1} parent=1 // pred_region
      %471 = vsyncadd [#allocation4], 0
      %s472 = sshll.u32 [#allocation7], 4
      %s473 = int_to_ptr.vmem [resolvable:$true] %s472
      %s474 = sshll.u32 %s3, 4
      %s475 = int_to_ptr.hbm [resolvable:$true] %s474
      %480 = dma.vmem_to_hbm [thread:$0]  %s473, 8192, %s475, [#allocation4], 128, 128, 8
    $region25: #{tpu_custom_call.1} parent=1 // pred_fallthru
      _
    // Predicated region
    $region26: #{tpu_custom_call.1} parent=1 // pred_check
      _
    $region27: #{tpu_custom_call.1} parent=1 // pred_check_branch
      %482 = sbr.rel (0) target = $region29
    $region28: #{tpu_custom_call.1} parent=1 // pred_region
      %484 = dma.done [#allocation4], 8192
    $region29: #{tpu_custom_call.1} parent=1 // pred_fallthru
      _
    %485 = vsyncpa [#allocation3], 1
    %486 = vsyncpa [#allocation6], 1
    %487 = vsyncpa [#allocation4], 1

</llo_original>
